<compile_context>
chip_gen: v7x
topology: tpu7x:2x2x1
jax: 0.10.0
libtpu: 0.0.40
codegen_flags: <defaults>
</compile_context>

<pallas_src>
import functools
import math

import jax
import jax.numpy as jnp
from jax.experimental import pallas as pl
from jax.experimental.pallas import tpu as pltpu


def _round_up(x, m):
    return ((x + m - 1) // m) * m


def _default_num_parallel():
    # Only v7x has 2 TensorCores per chip; on v5e/v6e a second "parallel"
    # slice is a serial loop that just adds duplicate (fully masked) tiles.
    try:
        kind = jax.devices()[0].device_kind.lower()
    except Exception:
        return 1
    return 2 if ("v7" in kind or "7x" in kind) else 1


def _layout_2d(op, full_shape, n_rows, n_cols):
    """View `op` (broadcastable to full_shape) as 2-D without materializing.

    Returns (array_2d, kind) with kind in {"full", "rowvec", "lanevec", "scalar"}.
    """
    op = jnp.asarray(op)
    if len(full_shape) == 0:
        return op.reshape(1, 1), "full"
    shp = (1,) * (len(full_shape) - op.ndim) + tuple(op.shape)
    lead = math.prod(shp[:-1])
    last = shp[-1]
    if lead == 1 and last == 1:
        return op.reshape(1, 1), "scalar"
    if lead == n_rows and last == n_cols:
        return op.reshape(n_rows, n_cols), "full"
    if lead == 1 and last == n_cols:
        return op.reshape(1, n_cols), "lanevec"
    if lead == n_rows and last == 1:
        return op.reshape(n_rows, 1), "rowvec"
    # Mixed partial broadcast (e.g. per-channel weight in NCHW layout): fall
    # back to materializing the full operand.
    return jnp.broadcast_to(op, full_shape).reshape(n_rows, n_cols), "full"


def _vmem_block_bytes(shape, dtype):
    r, c = shape
    return (_round_up(max(int(r), 1), 8) * _round_up(max(int(c), 1), 128)
            * jnp.dtype(dtype).itemsize)


def _wbce_kernel(logits_ref, targets_ref, weights_ref, out_ref, acc_ref, *,
                 n_rows, n_cols, tile_rows, d_tile,
                 rows_need_mask, cols_need_mask):
    c = pl.program_id(0)          # parallel (per-core) axis
    j = pl.program_id(1)          # row-reduction axis
    k = pl.program_id(2)          # lane-reduction axis
    nj = pl.num_programs(1)
    nk = pl.num_programs(2)

    @pl.when(jnp.logical_and(j == 0, k == 0))
    def _():
        acc_ref[...] = jnp.zeros_like(acc_ref)

    x = logits_ref[...].astype(jnp.float32)
    t = targets_ref[...].astype(jnp.float32)
    w = weights_ref[...].astype(jnp.float32)

    # Numerically stable BCE-with-logits (PyTorch's formulation):
    #   loss = max(x, 0) - x*t + log1p(exp(-|x|))
    loss = jnp.maximum(x, 0.0) - x * t + jnp.log1p(jnp.exp(-jnp.abs(x)))
    weighted = loss * w
    if weighted.shape != (tile_rows, d_tile):   # all operands broadcast case
        weighted = jnp.broadcast_to(weighted, (tile_rows, d_tile))

    def _accumulate(vals):
        # vreg-friendly partial accumulation: (tile_rows, d_tile) -> (8, d_tile)
        # with pure vector adds; the cross-lane reduce is deferred to the end.
        acc_ref[...] += vals.reshape(tile_rows // 8, 8, d_tile).sum(axis=0)

    if not (rows_need_mask or cols_need_mask):
        _accumulate(weighted)                    # no masking ever needed
    else:
        row0 = (c * nj + j) * tile_rows
        needs_mask = None
        if rows_need_mask:
            needs_mask = row0 + tile_rows > n_rows
        if cols_need_mask:
            cm = k == nk - 1
            needs_mask = cm if needs_mask is None else jnp.logical_or(needs_mask, cm)

        @pl.when(needs_mask)
        def _():
            mask = None
            if rows_need_mask:
                rid = row0 + jax.lax.broadcasted_iota(jnp.int32, (tile_rows, 1), 0)
                mask = rid < n_rows
            if cols_need_mask:
                cid = k * d_tile + jax.lax.broadcasted_iota(jnp.int32, (1, d_tile), 1)
                cmask = cid < n_cols
                mask = cmask if mask is None else jnp.logical_and(mask, cmask)
            # select (not multiply) so garbage in padded regions never propagates
            _accumulate(jnp.where(mask, weighted, 0.0))

        @pl.when(jnp.logical_not(needs_mask))
        def _():
            _accumulate(weighted)

    @pl.when(jnp.logical_and(j == nj - 1, k == nk - 1))
    def _():
        out_ref[...] = jnp.sum(acc_ref[...])[None, None]


def weighted_cross_entropy_loss(logits, targets, weights, *,
                                tile_rows=None, lane_tile=2048,
                                num_parallel=None,
                                target_block_bytes=1 << 20,
                                vmem_limit_bytes=None):
    """Pallas equivalent of WeightedCrossEntropyLoss.forward. Returns a scalar."""
    logits = jnp.asarray(logits)
    targets = jnp.asarray(targets)
    weights = jnp.asarray(weights)

    full_shape = jnp.broadcast_shapes(logits.shape, targets.shape, weights.shape)
    numel = math.prod(full_shape)
    if len(full_shape) == 0:
        n_rows, d = 1, 1
    elif len(full_shape) == 1:
        n_rows, d = 1, full_shape[0]
    else:
        n_rows, d = math.prod(full_shape[:-1]), full_shape[-1]

    # Classify each operand; broadcast operands stay unexpanded (no HBM pass).
    ops2, kinds = [], []
    for op in (logits, targets, weights):
        op2, kind = _layout_2d(op, full_shape, n_rows, d)
        ops2.append(op2)
        kinds.append(kind)

    # Lane (D) tiling so wide-D inputs stay inside the VMEM budget.
    lane_tile = _round_up(max(int(lane_tile), 128), 128)
    d_tile = d if d <= lane_tile else lane_tile
    d_steps = pl.cdiv(d, d_tile)

    # Row tiling: ~1 MiB (f32-equivalent) per streamed input block.
    if tile_rows is None:
        rows = max(16, target_block_bytes // (_round_up(d_tile, 128) * 4))
        rows = min(rows, n_rows)
        if rows >= 16:
            tile_rows = (rows // 16) * 16      # bf16-friendly sublane packing
        elif rows >= 8:
            tile_rows = 8
        else:
            tile_rows = 8                      # tiny inputs: single padded block
    else:
        tile_rows = _round_up(max(int(tile_rows), 8), 8)

    total_row_tiles = pl.cdiv(n_rows, tile_rows)
    if num_parallel is None:
        num_parallel = _default_num_parallel()
    num_parallel = max(1, min(int(num_parallel), total_row_tiles))
    inner = pl.cdiv(total_row_tiles, num_parallel)
    last_row_block = total_row_tiles - 1

    rows_need_mask = (num_parallel * inner * tile_rows) != n_rows
    cols_need_mask = (d % d_tile) != 0

    def row_block(c, j):
        # Clamp to a valid block; out-of-range logical blocks are fully masked.
        return jnp.minimum(c * inner + j, last_row_block)

    def make_spec(kind):
        if kind == "full":
            shape = (tile_rows, d_tile)
            return pl.BlockSpec(shape, lambda c, j, k: (row_block(c, j), k)), shape
        if kind == "rowvec":
            shape = (tile_rows, 1)
            return pl.BlockSpec(shape, lambda c, j, k: (row_block(c, j), 0)), shape
        if kind == "lanevec":
            shape = (1, d_tile)
            return pl.BlockSpec(shape, lambda c, j, k: (0, k)), shape
        shape = (1, 1)                         # scalar: VMEM-resident
        return pl.BlockSpec(shape, lambda c, j, k: (0, 0)), shape

    in_specs, block_shapes = [], []
    for kind in kinds:
        spec, shape = make_spec(kind)
        in_specs.append(spec)
        block_shapes.append(shape)

    # VMEM budget from the real footprint (double-buffered inputs + accumulator
    # + headroom for the elementwise f32 chain), capped for v7x's 64 MiB VMEM.
    if vmem_limit_bytes is None:
        footprint = sum(2 * _vmem_block_bytes(bs, op2.dtype)
                        for bs, op2 in zip(block_shapes, ops2))
        footprint += _vmem_block_bytes((8, d_tile), jnp.float32)
        footprint += 8 * _vmem_block_bytes((tile_rows, d_tile), jnp.float32)
        footprint += 2 << 20
        vmem_limit_bytes = int(max(32 << 20, min(footprint, 48 << 20)))

    kernel = functools.partial(
        _wbce_kernel,
        n_rows=n_rows, n_cols=d, tile_rows=tile_rows, d_tile=d_tile,
        rows_need_mask=rows_need_mask, cols_need_mask=cols_need_mask)

    partials = pl.pallas_call(
        kernel,
        out_shape=jax.ShapeDtypeStruct((num_parallel, 1), jnp.float32),
        grid_spec=pltpu.PrefetchScalarGridSpec(
            num_scalar_prefetch=0,
            grid=(num_parallel, inner, d_steps),
            in_specs=in_specs,
            out_specs=pl.BlockSpec((1, 1), lambda c, j, k: (c, 0)),
            scratch_shapes=[pltpu.VMEM((8, d_tile), jnp.float32)],
        ),
        compiler_params=pltpu.CompilerParams(
            dimension_semantics=("parallel", "arbitrary", "arbitrary"),
            vmem_limit_bytes=vmem_limit_bytes,
        ),
    )(*ops2)

    return jnp.sum(partials) / jnp.float32(numel)


def _reference(logits, targets, weights):
    full = jnp.broadcast_shapes(jnp.shape(logits), jnp.shape(targets),
                                jnp.shape(weights))
    x = jnp.asarray(logits).astype(jnp.float32)
    t = jnp.asarray(targets).astype(jnp.float32)
    w = jnp.asarray(weights).astype(jnp.float32)
    base = jnp.maximum(x, 0.0) - x * t + jnp.log1p(jnp.exp(-jnp.abs(x)))
    return jnp.mean(jnp.broadcast_to(base * w, full))


if __name__ == "__main__":
    key = jax.random.PRNGKey(0)
    keys = jax.random.split(key, 9)
    checks = []

    # 1) Dense f32 inputs (small, (8,128)-friendly).
    N, D = 32, 128
    lg = jax.random.normal(keys[0], (N, D), dtype=jnp.float32) * 2.0
    tg = (jax.random.uniform(keys[1], (N, D)) > 0.5).astype(jnp.float32)
    wt = jax.random.uniform(keys[2], (N, D), dtype=jnp.float32)
    checks.append((lg, tg, wt))

    # 2) 3-D logits/targets with a per-row broadcast weight and a row count
    #    that is not a tile multiple (exercises tail masking + rowvec stream).
    B, S = 2, 25
    lg = jax.random.normal(keys[3], (B, S, D), dtype=jnp.float32) * 2.0
    tg = (jax.random.uniform(keys[4], (B, S, D)) > 0.5).astype(jnp.float32)
    wt = jax.random.uniform(keys[5], (B, S, 1), dtype=jnp.float32)
    checks.append((lg, tg, wt))

    # 3) bf16 logits/targets streamed as bf16 with a per-class (lane-vector)
    #    f32 weight (exercises narrow-dtype streaming + lanevec residency).
    lg = (jax.random.normal(keys[6], (N, D), dtype=jnp.float32) * 2.0).astype(jnp.bfloat16)
    tg = (jax.random.uniform(keys[7], (N, D)) > 0.5).astype(jnp.bfloat16)
    wt = jax.random.uniform(keys[8], (D,), dtype=jnp.float32)
    checks.append((lg, tg, wt))

    for lg, tg, wt in checks:
        out = jax.block_until_ready(weighted_cross_entropy_loss(lg, tg, wt))
        ref = _reference(lg, tg, wt)
        assert jnp.allclose(out, ref, rtol=1e-4, atol=1e-6), (
            out, ref, lg.shape, tg.shape, wt.shape)

    print("KERNEL_OK")
</pallas_src>

<mosaic_0001>
module attributes {stable_mosaic.version = 11 : i64} {
  func.func @_wbce_kernel(%arg0: i32, %arg1: i32, %arg2: i32, %arg3: memref<32x128xf32, #tpu.memory_space<vmem>>, %arg4: memref<32x128xf32, #tpu.memory_space<vmem>>, %arg5: memref<32x128xf32, #tpu.memory_space<vmem>>, %arg6: memref<1x1xf32, #tpu.memory_space<vmem>>, %arg7: memref<8x128xf32, #tpu.memory_space<vmem>>) attributes {dimension_semantics = [#tpu.dimension_semantics<parallel>, #tpu.dimension_semantics<arbitrary>, #tpu.dimension_semantics<arbitrary>], iteration_bounds = array<i64: 1, 1, 1>, scalar_prefetch = 0 : i64, scratch_operands = 1 : i64, tpu.core_type = #tpu.core_type<tc>, window_params = [{transform_indices = @transform_0, window_bounds = array<i64: 32, 128>}, {transform_indices = @transform_1, window_bounds = array<i64: 32, 128>}, {transform_indices = @transform_2, window_bounds = array<i64: 32, 128>}, {transform_indices = @transform_3, window_bounds = array<i64: 1, 1>}]} {
    %c0_i32 = arith.constant 0 : i32
    %0 = arith.cmpi eq, %arg1, %c0_i32 : i32
    %c0_i32_0 = arith.constant 0 : i32
    %1 = arith.cmpi eq, %arg2, %c0_i32_0 : i32
    %2 = arith.andi %0, %1 : i1
    %3 = arith.extui %2 : i1 to i32
    %c0_i32_1 = arith.constant 0 : i32
    %4 = arith.cmpi ne, %3, %c0_i32_1 : i32
    scf.if %4 {
      %cst_16 = arith.constant 0.000000e+00 : f32
      %29 = vector.broadcast %cst_16 : f32 to vector<8x128xf32>
      %c0_17 = arith.constant 0 : index
      %c0_18 = arith.constant 0 : index
      %30 = vector.load %arg7[%c0_17, %c0_18] : memref<8x128xf32, #tpu.memory_space<vmem>>, vector<8x128xf32>
      tpu.vector_store %arg7[%c0_17, %c0_18], %29 {strides = array<i32>} : memref<8x128xf32, #tpu.memory_space<vmem>>, vector<8x128xf32>,
    } else {
    }
    %c0 = arith.constant 0 : index
    %c0_2 = arith.constant 0 : index
    %5 = vector.load %arg3[%c0, %c0_2] : memref<32x128xf32, #tpu.memory_space<vmem>>, vector<32x128xf32>
    %c0_3 = arith.constant 0 : index
    %c0_4 = arith.constant 0 : index
    %6 = vector.load %arg4[%c0_3, %c0_4] : memref<32x128xf32, #tpu.memory_space<vmem>>, vector<32x128xf32>
    %c0_5 = arith.constant 0 : index
    %c0_6 = arith.constant 0 : index
    %7 = vector.load %arg5[%c0_5, %c0_6] : memref<32x128xf32, #tpu.memory_space<vmem>>, vector<32x128xf32>
    %cst = arith.constant 0.000000e+00 : f32
    %8 = vector.broadcast %cst : f32 to vector<32x128xf32>
    %9 = arith.maximumf %5, %8 : vector<32x128xf32>
    %10 = arith.mulf %5, %6 : vector<32x128xf32>
    %11 = arith.subf %9, %10 : vector<32x128xf32>
    %12 = math.absf %5 : vector<32x128xf32>
    %cst_7 = arith.constant 0.000000e+00 : f32
    %13 = vector.broadcast %cst_7 : f32 to vector<32x128xf32>
    %14 = arith.subf %13, %12 : vector<32x128xf32>
    %15 = math.exp %14 : vector<32x128xf32>
    %16 = math.log1p %15 : vector<32x128xf32>
    %17 = arith.addf %11, %16 : vector<32x128xf32>
    %18 = arith.mulf %17, %7 : vector<32x128xf32>
    %c0_8 = arith.constant 0 : index
    %c0_9 = arith.constant 0 : index
    %19 = vector.load %arg7[%c0_8, %c0_9] : memref<8x128xf32, #tpu.memory_space<vmem>>, vector<8x128xf32>
    %20 = vector.shape_cast %18 : vector<32x128xf32> to vector<4x8x128xf32>
    %cst_10 = arith.constant dense<0.000000e+00> : vector<8x128xf32>
    %21 = vector.multi_reduction <add>, %20, %cst_10 [0] : vector<4x8x128xf32> to vector<8x128xf32>
    %22 = arith.addf %19, %21 : vector<8x128xf32>
    %c0_11 = arith.constant 0 : index
    %c0_12 = arith.constant 0 : index
    %23 = vector.load %arg7[%c0_11, %c0_12] : memref<8x128xf32, #tpu.memory_space<vmem>>, vector<8x128xf32>
    tpu.vector_store %arg7[%c0_11, %c0_12], %22 {strides = array<i32>} : memref<8x128xf32, #tpu.memory_space<vmem>>, vector<8x128xf32>,
    %c0_i32_13 = arith.constant 0 : i32
    %24 = arith.cmpi eq, %arg1, %c0_i32_13 : i32
    %c0_i32_14 = arith.constant 0 : i32
    %25 = arith.cmpi eq, %arg2, %c0_i32_14 : i32
    %26 = arith.andi %24, %25 : i1
    %27 = arith.extui %26 : i1 to i32
    %c0_i32_15 = arith.constant 0 : i32
    %28 = arith.cmpi ne, %27, %c0_i32_15 : i32
    scf.if %28 {
      %c0_16 = arith.constant 0 : index
      %c0_17 = arith.constant 0 : index
      %29 = vector.load %arg7[%c0_16, %c0_17] : memref<8x128xf32, #tpu.memory_space<vmem>>, vector<8x128xf32>
      %30 = vector.shape_cast %29 : vector<8x128xf32> to vector<1x8x128xf32>
      %cst_18 = arith.constant dense<0.000000e+00> : vector<1xf32>
      %31 = vector.multi_reduction <add>, %30, %cst_18 [1, 2] : vector<1x8x128xf32> to vector<1xf32>
      %32 = vector.shape_cast %31 : vector<1xf32> to vector<1x1x1xf32>
      %33 = vector.extract %32[0, 0, 0] : f32 from vector<1x1x1xf32>
      %34 = vector.broadcast %33 : f32 to vector<1x1xf32>
      %c0_19 = arith.constant 0 : index
      %c0_20 = arith.constant 0 : index
      %35 = vector.load %arg6[%c0_19, %c0_20] : memref<1x1xf32, #tpu.memory_space<vmem>>, vector<1x1xf32>
      tpu.vector_store %arg6[%c0_19, %c0_20], %34 {strides = array<i32>} : memref<1x1xf32, #tpu.memory_space<vmem>>, vector<1x1xf32>,
    } else {
    }
    return
  }
  func.func @transform_0(%arg0: i32, %arg1: i32, %arg2: i32) -> (i32, i32) {
    %c1_i32 = arith.constant 1 : i32
    %0 = arith.muli %arg0, %c1_i32 : i32
    %1 = arith.addi %0, %arg1 : i32
    %c0_i32 = arith.constant 0 : i32
    %2 = arith.minsi %1, %c0_i32 : i32
    %c0_i32_0 = arith.constant 0 : i32
    return %2, %arg2 : i32, i32
  }
  func.func @transform_1(%arg0: i32, %arg1: i32, %arg2: i32) -> (i32, i32) {
    %c1_i32 = arith.constant 1 : i32
    %0 = arith.muli %arg0, %c1_i32 : i32
    %1 = arith.addi %0, %arg1 : i32
    %c0_i32 = arith.constant 0 : i32
    %2 = arith.minsi %1, %c0_i32 : i32
    %c0_i32_0 = arith.constant 0 : i32
    return %2, %arg2 : i32, i32
  }
  func.func @transform_2(%arg0: i32, %arg1: i32, %arg2: i32) -> (i32, i32) {
    %c1_i32 = arith.constant 1 : i32
    %0 = arith.muli %arg0, %c1_i32 : i32
    %1 = arith.addi %0, %arg1 : i32
    %c0_i32 = arith.constant 0 : i32
    %2 = arith.minsi %1, %c0_i32 : i32
    %c0_i32_0 = arith.constant 0 : i32
    return %2, %arg2 : i32, i32
  }
  func.func @transform_3(%arg0: i32, %arg1: i32, %arg2: i32) -> (i32, i32) {
    %c0_i32 = arith.constant 0 : i32
    %c0_i32_0 = arith.constant 0 : i32
    return %arg0, %c0_i32 : i32, i32
  }
}

</mosaic_0001>

<llo_original>
// kernel: tpu_custom_call.1
$region0: #{tpu_custom_call.1}
  #allocation0 [shape = 'u32[]', space=smem, size = 0x4, offset = 0x4, fixed_abs, tag = 'smem constant byte address 0x4 - core index']
  #allocation1 [shape = 'u32[144,128]{1,0:T(1,128)}', space=vmem, size = 0x12000, scoped, tag = 'internal scratch']
  #allocation2 [shape = 'f32[8,128]{1,0:T(8,128)}', space=vmem, size = 0x1000, scoped, tag = 'scratch operand']
  %s0 = inlined_call_operand.hbm [shape: f32[32,128], index: 0, kind: input, shape index: {}]
  %s1 = inlined_call_operand.hbm [shape: f32[32,128], index: 1, kind: input, shape index: {}]
  %s2 = inlined_call_operand.hbm [shape: f32[32,128], index: 2, kind: input, shape index: {}]
  %s3 = inlined_call_operand.hbm [shape: f32[1,1], index: 3, kind: output, shape index: {}]
  %s4 = sld [smem:[#allocation0]]
  $region42: #{tpu_custom_call.1} parent=0
    _
  %s6 = ssub.s32 1, %s4
  %s7 = scalar_select 0, %s6, %s4
  $region1: #{tpu_custom_call.1} parent=0
    #allocation3 [shape = 'u8[16384]{0}', space=vmem, size = 0x4000, scoped, tag = 'input window, operand 0, single buffered']
    #allocation4 [shape = 's32[1]{0}', space=sflag, size = 0x4, scoped, tag = 'scoped memory for tpu_custom_call.1']
    #allocation5 [shape = 's32[1]{0}', space=sflag, size = 0x4, scoped, tag = 'scoped memory for tpu_custom_call.1']
    #allocation6 [shape = 'u8[16384]{0}', space=vmem, size = 0x4000, scoped, tag = 'input window, operand 1, single buffered']
    #allocation7 [shape = 's32[1]{0}', space=sflag, size = 0x4, scoped, tag = 'scoped memory for tpu_custom_call.1']
    #allocation8 [shape = 'u8[16384]{0}', space=vmem, size = 0x4000, scoped, tag = 'input window, operand 2, single buffered']
    #allocation9 [shape = 'u8[512]{0}', space=vmem, size = 0x400, scoped, tag = 'output window, operand 0, single buffered']
    %8 = vsyncpa [#allocation4], 0
    %9 = vsyncpa [#allocation7], 0
    %10 = vsyncpa [#allocation5], 0
    // Predicated region
    $region2: #{tpu_custom_call.1} parent=1 // pred_check
      _
    $region3: #{tpu_custom_call.1} parent=1 // pred_check_branch
      %12 = sbr.rel (0) target = $region5
    $region4: #{tpu_custom_call.1} parent=1 // pred_region
      %s13 = sadd.s32 0, 0
      %p14 = scmp.lt.s32.totalorder %s13, 0
      %s15 = scalar_select %p14, %s13, 0
      %s16 = smul.u32 4, %s15
      %s18 = ssub.s32 512, 512
      %19 = vsyncadd [#allocation4], %s18
      %s20 = smul.addr %s16, 128
      %s21 = scalar_lea.hbm %s0, %s20
      %s22 = sshll.u32 [#allocation3], 4
      %s23 = int_to_ptr.vmem [resolvable:$true] %s22
      %28 = dma.hbm_to_vmem [thread:$0]  %s21, 512, %s23, [#allocation4], 128, 128, 8
    $region5: #{tpu_custom_call.1} parent=1 // pred_fallthru
      _
    // Predicated region
    $region6: #{tpu_custom_call.1} parent=1 // pred_check
      _
    $region7: #{tpu_custom_call.1} parent=1 // pred_check_branch
      %30 = sbr.rel (0) target = $region9
    $region8: #{tpu_custom_call.1} parent=1 // pred_region
      %s31 = sadd.s32 0, 0
      %p32 = scmp.lt.s32.totalorder %s31, 0
      %s33 = scalar_select %p32, %s31, 0
      %s34 = smul.u32 4, %s33
      %s36 = ssub.s32 512, 512
      %37 = vsyncadd [#allocation7], %s36
      %s38 = smul.addr %s34, 128
      %s39 = scalar_lea.hbm %s1, %s38
      %s40 = sshll.u32 [#allocation6], 4
      %s41 = int_to_ptr.vmem [resolvable:$true] %s40
      %46 = dma.hbm_to_vmem [thread:$0]  %s39, 512, %s41, [#allocation7], 128, 128, 8
    $region9: #{tpu_custom_call.1} parent=1 // pred_fallthru
      _
    // Predicated region
    $region10: #{tpu_custom_call.1} parent=1 // pred_check
      _
    $region11: #{tpu_custom_call.1} parent=1 // pred_check_branch
      %48 = sbr.rel (0) target = $region13
    $region12: #{tpu_custom_call.1} parent=1 // pred_region
      %s49 = sadd.s32 0, 0
      %p50 = scmp.lt.s32.totalorder %s49, 0
      %s51 = scalar_select %p50, %s49, 0
      %s52 = smul.u32 4, %s51
      %s54 = ssub.s32 512, 512
      %55 = vsyncadd [#allocation7], %s54
      %s56 = smul.addr %s52, 128
      %s57 = scalar_lea.hbm %s2, %s56
      %s58 = sshll.u32 [#allocation8], 4
      %s59 = int_to_ptr.vmem [resolvable:$true] %s58
      %64 = dma.hbm_to_vmem [thread:$0]  %s57, 512, %s59, [#allocation7], 128, 128, 8
    $region13: #{tpu_custom_call.1} parent=1 // pred_fallthru
      _
    // Predicated region
    $region14: #{tpu_custom_call.1} parent=1 // pred_check
      _
    $region15: #{tpu_custom_call.1} parent=1 // pred_check_branch
      %66 = sbr.rel (0) target = $region17
    $region16: #{tpu_custom_call.1} parent=1 // pred_region
      %67 = dma.done [#allocation4], 512
    $region17: #{tpu_custom_call.1} parent=1 // pred_fallthru
      _
    // Predicated region
    $region18: #{tpu_custom_call.1} parent=1 // pred_check
      _
    $region19: #{tpu_custom_call.1} parent=1 // pred_check_branch
      %69 = sbr.rel (0) target = $region21
    $region20: #{tpu_custom_call.1} parent=1 // pred_region
      %70 = dma.done [#allocation7], 512
    $region21: #{tpu_custom_call.1} parent=1 // pred_fallthru
      _
    // Predicated region
    $region22: #{tpu_custom_call.1} parent=1 // pred_check
      _
    $region23: #{tpu_custom_call.1} parent=1 // pred_check_branch
      %72 = sbr.rel (0) target = $region25
    $region24: #{tpu_custom_call.1} parent=1 // pred_region
      %73 = dma.done [#allocation7], 512
    $region25: #{tpu_custom_call.1} parent=1 // pred_fallthru
      _
    %s74 = sadd.s32 0, 0
    %p75 = scmp.lt.s32.totalorder %s74, 0
    %s76 = scalar_select %p75, %s74, 0
    %s77 = smul.u32 4, %s76
    %s78 = sadd.s32 0, 0
    %p79 = scmp.lt.s32.totalorder %s78, 0
    %s80 = scalar_select %p79, %s78, 0
    %s81 = smul.u32 4, %s80
    %s82 = sadd.s32 0, 0
    %p83 = scmp.lt.s32.totalorder %s82, 0
    %s84 = scalar_select %p83, %s82, 0
    %s85 = smul.u32 4, %s84
    %p86 = scmp.eq.s32.totalorder 0, 0
    %p87 = scmp.eq.s32.totalorder 0, 0
    %p88 = pnand %p86, %p87
    %p89 = pneg %p88
    // Predicated region
    $region26: #{tpu_custom_call.1} parent=1 // pred_check
      _
    $region27: #{tpu_custom_call.1} parent=1 // pred_check_branch
      %91 = sbr.rel (%p88) target = $region29
    $region28: #{tpu_custom_call.1} parent=1 // pred_region
      %92 = vst [vmem:[#allocation2] sm:$0xff] 0.0
    $region29: #{tpu_custom_call.1} parent=1 // pred_fallthru
      _
    %v93 = vld [vmem:[#allocation3] sm:$0xff]
    %v94 = vld [vmem:[#allocation3 + $0x8] sm:$0xff]
    %v95 = vld [vmem:[#allocation3 + $0x10] sm:$0xff]
    %v96 = vld [vmem:[#allocation3 + $0x18] sm:$0xff]
    %v97 = vld [vmem:[#allocation6] sm:$0xff]
    %v98 = vld [vmem:[#allocation6 + $0x8] sm:$0xff]
    %v99 = vld [vmem:[#allocation6 + $0x10] sm:$0xff]
    %v100 = vld [vmem:[#allocation6 + $0x18] sm:$0xff]
    %v101 = vld [vmem:[#allocation8] sm:$0xff]
    %v102 = vld [vmem:[#allocation8 + $0x8] sm:$0xff]
    %v103 = vld [vmem:[#allocation8 + $0x10] sm:$0xff]
    %v104 = vld [vmem:[#allocation8 + $0x18] sm:$0xff]
    %v105 = vmax.f32 %v93, 0.0
    %v106 = vmax.f32 %v94, 0.0
    %v107 = vmax.f32 %v95, 0.0
    %v108 = vmax.f32 %v96, 0.0
    %v109 = vmul.f32 %v93, %v97
    %v110 = vmul.f32 %v94, %v98
    %v111 = vmul.f32 %v95, %v99
    %v112 = vmul.f32 %v96, %v100
    %v113 = vsub.f32 %v105, %v109
    %v114 = vsub.f32 %v106, %v110
    %v115 = vsub.f32 %v107, %v111
    %v116 = vsub.f32 %v108, %v112
    %v117 = vand.u32 2147483647, %v93
    %v118 = vand.u32 2147483647, %v94
    %v119 = vand.u32 2147483647, %v95
    %v120 = vand.u32 2147483647, %v96
    %v121 = vsub.f32 0.0, %v117
    %v122 = vsub.f32 0.0, %v118
    %v123 = vsub.f32 0.0, %v119
    %v124 = vsub.f32 0.0, %v120
    %v125 = vmul.f32 %v121, 1.442695
    %v126 = vpow.pop %v125
    %v127 = vmul.f32 %v122, 1.442695
    %v128 = vpow.pop %v127
    %v129 = vmul.f32 %v123, 1.442695
    %v130 = vpow.pop %v129
    %v131 = vmul.f32 %v124, 1.442695
    %v132 = vpow.pop %v131
    %v133 = vadd.f32 %v126, 1.0
    %v134 = vlog2.pop %v133
    %v135 = vmul.f32 %v134, 0.6931472
    %v136 = vmul.f32 -0.5, %v126
    %v137 = vadd.f32 %v136, 1.0
    %v138 = vmul.f32 %v137, %v126
    %v139 = vand.u32 2147483647, %v126
    %vm140 = vcmp.lt.f32.partialorder %v139, 0.0004427343
    %v141 = vsel %vm140, %v138, %v135
    %v142 = vadd.f32 %v128, 1.0
    %v143 = vlog2.pop %v142
    %v144 = vmul.f32 %v143, 0.6931472
    %v145 = vmul.f32 -0.5, %v128
    %v146 = vadd.f32 %v145, 1.0
    %v147 = vmul.f32 %v146, %v128
    %v148 = vand.u32 2147483647, %v128
    %vm149 = vcmp.lt.f32.partialorder %v148, 0.0004427343
    %v150 = vsel %vm149, %v147, %v144
    %v151 = vadd.f32 %v130, 1.0
    %v152 = vlog2.pop %v151
    %v153 = vmul.f32 %v152, 0.6931472
    %v154 = vmul.f32 -0.5, %v130
    %v155 = vadd.f32 %v154, 1.0
    %v156 = vmul.f32 %v155, %v130
    %v157 = vand.u32 2147483647, %v130
    %vm158 = vcmp.lt.f32.partialorder %v157, 0.0004427343
    %v159 = vsel %vm158, %v156, %v153
    %v160 = vadd.f32 %v132, 1.0
    %v161 = vlog2.pop %v160
    %v162 = vmul.f32 %v161, 0.6931472
    %v163 = vmul.f32 -0.5, %v132
    %v164 = vadd.f32 %v163, 1.0
    %v165 = vmul.f32 %v164, %v132
    %v166 = vand.u32 2147483647, %v132
    %vm167 = vcmp.lt.f32.partialorder %v166, 0.0004427343
    %v168 = vsel %vm167, %v165, %v162
    %v169 = vadd.f32 %v113, %v141
    %v170 = vadd.f32 %v114, %v150
    %v171 = vadd.f32 %v115, %v159
    %v172 = vadd.f32 %v116, %v168
    %v173 = vmul.f32 %v169, %v101
    %v174 = vmul.f32 %v170, %v102
    %v175 = vmul.f32 %v171, %v103
    %v176 = vmul.f32 %v172, %v104
    %v177 = vld [vmem:[#allocation2] sm:$0xff]
    %v178 = vadd.f32 %v173, %v174
    %v179 = vadd.f32 %v178, %v175
    %v180 = vadd.f32 %v179, %v176
    %v181 = vadd.f32 %v177, %v180
    %182 = vst [vmem:[#allocation2] sm:$0xff] %v181
    // Predicated region
    $region30: #{tpu_custom_call.1} parent=1 // pred_check
      _
    $region31: #{tpu_custom_call.1} parent=1 // pred_check_branch
      %184 = sbr.rel (%p88) target = $region33
    $region32: #{tpu_custom_call.1} parent=1 // pred_region
      %v185 = vld [vmem:[#allocation2] sm:$0xff]
      %186 = vadd.xlane.f32.xlu0 %v185
      %v187 = vpop.xlane.xlu0 %186
      %v188 = vrot.slane %v187, 4
      %v189 = vadd.f32 %v187, %v188
      %v190 = vrot.slane %v189, 2
      %v191 = vadd.f32 %v189, %v190
      %v192 = vrot.slane %v191, 1
      %v193 = vadd.f32 %v191, %v192
      %s194 = vtos %v193
      %v195 = vstv %s194
      %vm196 = vcmask 0
      %197 = vst.msk [vmem:[#allocation9] sm:$0x1] %vm196, %v195
    $region33: #{tpu_custom_call.1} parent=1 // pred_fallthru
      _
    // Predicated region
    $region34: #{tpu_custom_call.1} parent=1 // pred_check
      _
    $region35: #{tpu_custom_call.1} parent=1 // pred_check_branch
      %199 = sbr.rel (0) target = $region37
    $region36: #{tpu_custom_call.1} parent=1 // pred_region
      %s201 = ssub.s32 16, 16
      %202 = vsyncadd [#allocation5], %s201
      %s204 = sshll.u32 [#allocation9], 4
      %s205 = int_to_ptr.vmem [resolvable:$true] %s204
      %207 = dma.vmem_to_hbm [thread:$0]  %s205, 16, %s3, [#allocation5]
    $region37: #{tpu_custom_call.1} parent=1 // pred_fallthru
      _
    // Predicated region
    $region38: #{tpu_custom_call.1} parent=1 // pred_check
      _
    $region39: #{tpu_custom_call.1} parent=1 // pred_check_branch
      %209 = sbr.rel (0) target = $region41
    $region40: #{tpu_custom_call.1} parent=1 // pred_region
      %210 = dma.done [#allocation5], 16
    $region41: #{tpu_custom_call.1} parent=1 // pred_fallthru
      _
    %211 = vsyncpa [#allocation4], 1
    %212 = vsyncpa [#allocation7], 1
    %213 = vsyncpa [#allocation5], 1

</llo_original>
